<compile_context>
chip_gen: v6e
topology: v6e:2x2x1
jax: 0.10.0
libtpu: 0.0.40
codegen_flags: <defaults>
</compile_context>

<pallas_src>
import functools

import jax
import jax.numpy as jnp
from jax import lax
from jax.experimental import pallas as pl
from jax.experimental.pallas import tpu as pltpu

_LANE = 128
_TARGET_BLOCK_BYTES = 8 << 20   # ~8 MiB input blocks (sized by bytes)
_SMALL_BYTES = 512 << 10        # below this, a single fused XLA reduce wins
_CHUNK_ROWS = 1024              # in-kernel accumulation granularity (mult of 32)


def _round_up(n, m):
    return ((n + m - 1) // m) * m


def _block_sum(x_ref, *, rows_to_sum, chunk_rows, base_row=0, valid_rows=None):
    """Sum the first `rows_to_sum` rows of x_ref into an (8, lane) f32 tile.

    `rows_to_sum` / `chunk_rows` are static multiples of 8.  If `valid_rows`
    is given, rows whose global index (base_row + r) >= valid_rows are zeroed
    (only used for the final, partial block).  Accumulating chunk-by-chunk
    keeps the f32-cast intermediates small (~chunk_rows*128*4 bytes).
    """
    lane = x_ref.shape[-1]

    def chunk(start, nrows):
        sub = x_ref[pl.ds(start, nrows), :].astype(jnp.float32)
        if valid_rows is not None:
            rid = lax.broadcasted_iota(jnp.int32, sub.shape, 0) + (base_row + start)
            sub = jnp.where(rid < valid_rows, sub, 0.0)
        # (nrows, lane) -> (nrows//8, 8, lane) is a layout-preserving split of
        # the sublane dim; the axis-0 sum is vreg-wise VPU adds (no per-chunk
        # cross-lane reduce, no masked scalar stores).
        return jnp.sum(sub.reshape(nrows // 8, 8, lane), axis=0)

    acc = jnp.zeros((8, lane), jnp.float32)
    n_full = rows_to_sum // chunk_rows
    rem = rows_to_sum % chunk_rows
    if n_full > 0:
        def body(c, a):
            start = pl.multiple_of(c * chunk_rows, chunk_rows)
            return a + chunk(start, chunk_rows)
        acc = lax.fori_loop(0, n_full, body, acc)
    if rem > 0:
        acc = acc + chunk(n_full * chunk_rows, rem)
    return acc


def _partial_sum_kernel(x_ref, psum_ref, *, tile_rows, valid_rows, chunk_rows,
                        min_rows):
    """Partial sum of one (tile_rows, 128) slab into a lane-dense (8,128) tile."""
    nblk = -(-valid_rows // tile_rows)         # static
    ragged = (valid_rows % tile_rows) != 0     # static

    def full_block():
        psum_ref[...] = _block_sum(
            x_ref, rows_to_sum=tile_rows, chunk_rows=chunk_rows,
        ).reshape(psum_ref.shape)

    if not ragged:
        full_block()
        return

    last = nblk - 1
    i = pl.program_id(0)

    @pl.when(i != last)
    def _():
        # N-1 of N blocks: no mask at all (review item: mask was previously
        # emitted for every block).
        full_block()

    @pl.when(i == last)
    def _():
        # Only the final, partial block pays for the row mask, and it only
        # touches the chunks that can contain valid rows.
        valid_in_last = valid_rows - last * tile_rows            # static
        rows_to_sum = min(tile_rows, _round_up(valid_in_last, min_rows))
        psum_ref[...] = _block_sum(
            x_ref, rows_to_sum=rows_to_sum, chunk_rows=chunk_rows,
            base_row=last * tile_rows, valid_rows=valid_rows,
        ).reshape(psum_ref.shape)


def _block_partial_sums(x2d, *, tile_rows, chunk_rows, min_rows, allow_fusion):
    rows, lane = x2d.shape
    nblk = pl.cdiv(rows, tile_rows)
    kernel = functools.partial(
        _partial_sum_kernel, tile_rows=tile_rows, valid_rows=rows,
        chunk_rows=chunk_rows, min_rows=min_rows)

    itemsize = jnp.dtype(x2d.dtype).itemsize
    in_block_bytes = tile_rows * lane * itemsize
    # Double-buffered input + chunk temporaries + compiler slack; explicitly
    # raised so ~8 MiB blocks also work under v5e's 16 MiB scoped default.
    vmem_limit = max(16 << 20, 2 * in_block_bytes + (6 << 20))
    out_bytes = nblk * 8 * lane * 4

    return pl.pallas_call(
        kernel,
        out_shape=jax.ShapeDtypeStruct((nblk, 8, lane), jnp.float32),
        grid_spec=pltpu.PrefetchScalarGridSpec(
            num_scalar_prefetch=0,
            grid=(nblk,),
            in_specs=[pl.BlockSpec((tile_rows, lane), lambda i: (i, 0))],
            out_specs=pl.BlockSpec((1, 8, lane), lambda i: (i, 0, 0)),
        ),
        compiler_params=pltpu.CompilerParams(
            dimension_semantics=("parallel",),
            vmem_limit_bytes=int(vmem_limit),
            # Let XLA fuse the bulk-slice producer into the operand for ragged
            # inputs instead of materializing a copy in HBM.
            allow_input_fusion=[True] if allow_fusion else None,
        ),
        cost_estimate=pl.CostEstimate(
            flops=int(x2d.size),
            transcendentals=0,
            bytes_accessed=int(x2d.size) * itemsize + out_bytes,
        ),
    )(x2d)


def show_layer_output_statics(x, *, block_bytes=_TARGET_BLOCK_BYTES,
                              small_bytes=_SMALL_BYTES):
    """Returns (x, mean(x)).

    Mirrors the PyTorch module: the output tensor is x unchanged (returned
    directly, no kernel copy); the mean that PyTorch writes to a file is
    computed on-device and returned as the second value (f32 scalar).
    """
    total = int(x.size)
    itemsize = jnp.dtype(x.dtype).itemsize
    flat = x.reshape(-1)

    # Sub-32-bit dtypes pack along sublanes: keep row blocks tile-aligned.
    min_rows = {4: 8, 2: 16, 1: 32}.get(itemsize, 8)
    rows = total // _LANE

    if total * itemsize < small_bytes or rows < min_rows:
        # Small layer output: the pallas_call launch + follow-up reduce would
        # dominate; a single fused XLA reduction is faster.
        return x, jnp.mean(flat.astype(jnp.float32))

    bulk = rows * _LANE
    tail = total - bulk

    # Block sized by bytes (~8 MiB), rounded down to the dtype's native
    # sublane tile, clamped to the (rounded-up) total row count.
    target_rows = max(min_rows,
                      (block_bytes // (_LANE * itemsize)) // min_rows * min_rows)
    rows_ceil = _round_up(rows, min_rows)
    tile_rows = min(target_rows, rows_ceil)

    if tail == 0:
        x2d = flat.reshape(rows, _LANE)   # contiguous reshape, no pad copy
    else:
        # Ragged tail (< 128 elems): kernel reduces the aligned bulk (slice is
        # allowed to fuse into the pallas operand); the tiny tail is reduced
        # in plain JAX.
        x2d = lax.slice(flat, (0,), (bulk,)).reshape(rows, _LANE)

    partials = _block_partial_sums(
        x2d, tile_rows=tile_rows, chunk_rows=_CHUNK_ROWS, min_rows=min_rows,
        allow_fusion=(tail != 0))
    total_sum = jnp.sum(partials)
    if tail != 0:
        total_sum = total_sum + jnp.sum(
            lax.slice(flat, (bulk,), (total,)).astype(jnp.float32))
    mean = total_sum / jnp.float32(total)
    return x, mean


if __name__ == "__main__":
    key = jax.random.PRNGKey(0)
    k1, k2, k3, k4 = jax.random.split(key, 4)

    # 1) Small layer output (typical toy shape for the module) -> fused XLA
    #    fast path (below the 512 KiB threshold).
    x1 = jax.random.normal(k1, (2, 4, 16, 16), dtype=jnp.float32)  # NCHW
    y1, m1 = show_layer_output_statics(x1)
    y1, m1 = jax.block_until_ready(y1), jax.block_until_ready(m1)
    assert y1.shape == x1.shape and y1.dtype == x1.dtype
    assert bool(jnp.allclose(y1, x1))
    assert bool(jnp.allclose(m1, jnp.mean(x1), atol=1e-5, rtol=1e-5))

    # 2) Lane-aligned activation large enough for the Pallas path (one block).
    x2 = jax.random.normal(k2, (8, 16, 32, 32), dtype=jnp.float32)
    y2, m2 = show_layer_output_statics(x2)
    y2, m2 = jax.block_until_ready(y2), jax.block_until_ready(m2)
    assert bool(jnp.allclose(y2, x2))
    assert bool(jnp.allclose(m2, jnp.mean(x2), atol=1e-5, rtol=1e-5))

    # 3) Ragged element count (not a multiple of 128) with a small forced
    #    block size -> multi-block grid, pl.when-gated masked last block,
    #    fused slice, and plain-JAX lane tail.
    x3 = jax.random.normal(k3, (7, 13, 41, 37), dtype=jnp.float32)
    y3, m3 = show_layer_output_statics(x3, block_bytes=256 * 1024)
    y3, m3 = jax.block_until_ready(y3), jax.block_until_ready(m3)
    assert bool(jnp.allclose(y3, x3))
    assert bool(jnp.allclose(m3, jnp.mean(x3), atol=1e-5, rtol=1e-5))

    # 4) bf16 activation through the Pallas path (sublane packing = 16 rows,
    #    chunked f32 accumulation keeps temporaries small).
    x4 = jax.random.normal(k4, (16, 16, 32, 32), dtype=jnp.bfloat16)
    y4, m4 = show_layer_output_statics(x4)
    y4, m4 = jax.block_until_ready(y4), jax.block_until_ready(m4)
    assert bool(jnp.allclose(y4, x4))
    assert bool(jnp.allclose(m4, jnp.mean(x4.astype(jnp.float32)),
                             atol=1e-5, rtol=1e-5))

    print("KERNEL_OK")
</pallas_src>

<mosaic_0001>
module attributes {stable_mosaic.version = 11 : i64} {
  func.func @_partial_sum_kernel(%arg0: i32, %arg1: memref<1024x128xf32, #tpu.memory_space<vmem>>, %arg2: memref<1x8x128xf32, #tpu.memory_space<vmem>>) attributes {dimension_semantics = [#tpu.dimension_semantics<parallel>], iteration_bounds = array<i64: 1>, scalar_prefetch = 0 : i64, scratch_operands = 0 : i64, tpu.core_type = #tpu.core_type<tc>, window_params = [{transform_indices = @transform_0, window_bounds = array<i64: 1024, 128>}, {transform_indices = @transform_1, window_bounds = array<i64: 1, 8, 128>}]} {
    %cst = arith.constant 0.000000e+00 : f32
    %0 = vector.broadcast %cst : f32 to vector<8x128xf32>
    %c0_i32 = arith.constant 0 : i32
    %c1024_i32 = arith.constant 1024 : i32
    %1 = arith.muli %c0_i32, %c1024_i32 : i32
    %2 = tpu.assume_multiple %1, 1024 : i32
    %3 = arith.index_cast %2 : i32 to index
    %c0 = arith.constant 0 : index
    %4 = vector.load %arg1[%3, %c0] : memref<1024x128xf32, #tpu.memory_space<vmem>>, vector<1024x128xf32>
    %5 = vector.shape_cast %4 : vector<1024x128xf32> to vector<128x8x128xf32>
    %cst_0 = arith.constant dense<0.000000e+00> : vector<8x128xf32>
    %6 = vector.multi_reduction <add>, %5, %cst_0 [0] : vector<128x8x128xf32> to vector<8x128xf32>
    %7 = arith.addf %0, %6 : vector<8x128xf32>
    %c1_i32 = arith.constant 1 : i32
    %8 = vector.shape_cast %7 : vector<8x128xf32> to vector<1x8x128xf32>
    %c0_1 = arith.constant 0 : index
    %c0_2 = arith.constant 0 : index
    %c0_3 = arith.constant 0 : index
    %9 = vector.load %arg2[%c0_1, %c0_2, %c0_3] : memref<1x8x128xf32, #tpu.memory_space<vmem>>, vector<1x8x128xf32>
    tpu.vector_store %arg2[%c0_1, %c0_2, %c0_3], %8 {strides = array<i32>} : memref<1x8x128xf32, #tpu.memory_space<vmem>>, vector<1x8x128xf32>,
    return
  }
  func.func @transform_0(%arg0: i32) -> (i32, i32) {
    %c0_i32 = arith.constant 0 : i32
    %c0_i32_0 = arith.constant 0 : i32
    return %arg0, %c0_i32 : i32, i32
  }
  func.func @transform_1(%arg0: i32) -> (i32, i32, i32) {
    %c0_i32 = arith.constant 0 : i32
    %c0_i32_0 = arith.constant 0 : i32
    %c0_i32_1 = arith.constant 0 : i32
    return %arg0, %c0_i32, %c0_i32_0 : i32, i32, i32
  }
}

</mosaic_0001>

<llo_original>
// kernel: tpu_custom_call.1
$region0: #{tpu_custom_call.1}
  #allocation0 [shape = 'u32[]', space=smem, size = 0x4, offset = 0x4, fixed_abs, tag = 'smem constant byte address 0x4 - core index']
  #allocation1 [shape = 'u32[144,128]{1,0:T(1,128)}', space=vmem, size = 0x12000, scoped, tag = 'internal scratch']
  %s0 = inlined_call_operand.hbm [shape: f32[1024,128], index: 0, kind: input, shape index: {}]
  %s1 = inlined_call_operand.hbm [shape: f32[1,8,128], index: 1, kind: output, shape index: {}]
  %s2 = sld [smem:[#allocation0]]
  $region18: #{tpu_custom_call.1} parent=0
    _
  %s4 = ssub.s32 1, %s2
  %s5 = scalar_select 0, %s4, %s2
  $region1: #{tpu_custom_call.1} parent=0
    #allocation2 [shape = 'u8[524288]{0}', space=vmem, size = 0x80000, scoped, tag = 'input window, operand 0, single buffered']
    #allocation3 [shape = 's32[1]{0}', space=sflag, size = 0x4, scoped, tag = 'scoped memory for tpu_custom_call.1']
    #allocation4 [shape = 's32[1]{0}', space=sflag, size = 0x4, scoped, tag = 'scoped memory for tpu_custom_call.1']
    #allocation5 [shape = 'u8[4096]{0}', space=vmem, size = 0x1000, scoped, tag = 'output window, operand 0, single buffered']
    %6 = vsyncpa [#allocation3], 0
    %7 = vsyncpa [#allocation4], 0
    // Predicated region
    $region2: #{tpu_custom_call.1} parent=1 // pred_check
      _
    $region3: #{tpu_custom_call.1} parent=1 // pred_check_branch
      %9 = sbr.rel (0) target = $region5
    $region4: #{tpu_custom_call.1} parent=1 // pred_region
      %s11 = ssub.s32 16384, 16384
      %12 = vsyncadd [#allocation3], %s11
      %s13 = sshll.u32 [#allocation2], 4
      %s14 = int_to_ptr.vmem [resolvable:$true] %s13
      %19 = dma.hbm_to_vmem [thread:$0]  %s0, 16384, %s14, [#allocation3], 128, 128, 8
    $region5: #{tpu_custom_call.1} parent=1 // pred_fallthru
      _
    // Predicated region
    $region6: #{tpu_custom_call.1} parent=1 // pred_check
      _
    $region7: #{tpu_custom_call.1} parent=1 // pred_check_branch
      %21 = sbr.rel (0) target = $region9
    $region8: #{tpu_custom_call.1} parent=1 // pred_region
      %22 = dma.done [#allocation3], 16384
    $region9: #{tpu_custom_call.1} parent=1 // pred_fallthru
      _
    %v23 = vld [vmem:[#allocation2] sm:$0xff]
    %v24 = vld [vmem:[#allocation2 + $0x8] sm:$0xff]
    %v25 = vld [vmem:[#allocation2 + $0x10] sm:$0xff]
    %v26 = vld [vmem:[#allocation2 + $0x18] sm:$0xff]
    %v27 = vld [vmem:[#allocation2 + $0x20] sm:$0xff]
    %v28 = vld [vmem:[#allocation2 + $0x28] sm:$0xff]
    %v29 = vld [vmem:[#allocation2 + $0x30] sm:$0xff]
    %v30 = vld [vmem:[#allocation2 + $0x38] sm:$0xff]
    %v31 = vld [vmem:[#allocation2 + $0x40] sm:$0xff]
    %v32 = vld [vmem:[#allocation2 + $0x48] sm:$0xff]
    %v33 = vld [vmem:[#allocation2 + $0x50] sm:$0xff]
    %v34 = vld [vmem:[#allocation2 + $0x58] sm:$0xff]
    %v35 = vld [vmem:[#allocation2 + $0x60] sm:$0xff]
    %v36 = vld [vmem:[#allocation2 + $0x68] sm:$0xff]
    %v37 = vld [vmem:[#allocation2 + $0x70] sm:$0xff]
    %v38 = vld [vmem:[#allocation2 + $0x78] sm:$0xff]
    %v39 = vld [vmem:[#allocation2 + $0x80] sm:$0xff]
    %v40 = vld [vmem:[#allocation2 + $0x88] sm:$0xff]
    %v41 = vld [vmem:[#allocation2 + $0x90] sm:$0xff]
    %v42 = vld [vmem:[#allocation2 + $0x98] sm:$0xff]
    %v43 = vld [vmem:[#allocation2 + $0xa0] sm:$0xff]
    %v44 = vld [vmem:[#allocation2 + $0xa8] sm:$0xff]
    %v45 = vld [vmem:[#allocation2 + $0xb0] sm:$0xff]
    %v46 = vld [vmem:[#allocation2 + $0xb8] sm:$0xff]
    %v47 = vld [vmem:[#allocation2 + $0xc0] sm:$0xff]
    %v48 = vld [vmem:[#allocation2 + $0xc8] sm:$0xff]
    %v49 = vld [vmem:[#allocation2 + $0xd0] sm:$0xff]
    %v50 = vld [vmem:[#allocation2 + $0xd8] sm:$0xff]
    %v51 = vld [vmem:[#allocation2 + $0xe0] sm:$0xff]
    %v52 = vld [vmem:[#allocation2 + $0xe8] sm:$0xff]
    %v53 = vld [vmem:[#allocation2 + $0xf0] sm:$0xff]
    %v54 = vld [vmem:[#allocation2 + $0xf8] sm:$0xff]
    %v55 = vld [vmem:[#allocation2 + $0x100] sm:$0xff]
    %v56 = vld [vmem:[#allocation2 + $0x108] sm:$0xff]
    %v57 = vld [vmem:[#allocation2 + $0x110] sm:$0xff]
    %v58 = vld [vmem:[#allocation2 + $0x118] sm:$0xff]
    %v59 = vld [vmem:[#allocation2 + $0x120] sm:$0xff]
    %v60 = vld [vmem:[#allocation2 + $0x128] sm:$0xff]
    %v61 = vld [vmem:[#allocation2 + $0x130] sm:$0xff]
    %v62 = vld [vmem:[#allocation2 + $0x138] sm:$0xff]
    %v63 = vld [vmem:[#allocation2 + $0x140] sm:$0xff]
    %v64 = vld [vmem:[#allocation2 + $0x148] sm:$0xff]
    %v65 = vld [vmem:[#allocation2 + $0x150] sm:$0xff]
    %v66 = vld [vmem:[#allocation2 + $0x158] sm:$0xff]
    %v67 = vld [vmem:[#allocation2 + $0x160] sm:$0xff]
    %v68 = vld [vmem:[#allocation2 + $0x168] sm:$0xff]
    %v69 = vld [vmem:[#allocation2 + $0x170] sm:$0xff]
    %v70 = vld [vmem:[#allocation2 + $0x178] sm:$0xff]
    %v71 = vld [vmem:[#allocation2 + $0x180] sm:$0xff]
    %v72 = vld [vmem:[#allocation2 + $0x188] sm:$0xff]
    %v73 = vld [vmem:[#allocation2 + $0x190] sm:$0xff]
    %v74 = vld [vmem:[#allocation2 + $0x198] sm:$0xff]
    %v75 = vld [vmem:[#allocation2 + $0x1a0] sm:$0xff]
    %v76 = vld [vmem:[#allocation2 + $0x1a8] sm:$0xff]
    %v77 = vld [vmem:[#allocation2 + $0x1b0] sm:$0xff]
    %v78 = vld [vmem:[#allocation2 + $0x1b8] sm:$0xff]
    %v79 = vld [vmem:[#allocation2 + $0x1c0] sm:$0xff]
    %v80 = vld [vmem:[#allocation2 + $0x1c8] sm:$0xff]
    %v81 = vld [vmem:[#allocation2 + $0x1d0] sm:$0xff]
    %v82 = vld [vmem:[#allocation2 + $0x1d8] sm:$0xff]
    %v83 = vld [vmem:[#allocation2 + $0x1e0] sm:$0xff]
    %v84 = vld [vmem:[#allocation2 + $0x1e8] sm:$0xff]
    %v85 = vld [vmem:[#allocation2 + $0x1f0] sm:$0xff]
    %v86 = vld [vmem:[#allocation2 + $0x1f8] sm:$0xff]
    %v87 = vld [vmem:[#allocation2 + $0x200] sm:$0xff]
    %v88 = vld [vmem:[#allocation2 + $0x208] sm:$0xff]
    %v89 = vld [vmem:[#allocation2 + $0x210] sm:$0xff]
    %v90 = vld [vmem:[#allocation2 + $0x218] sm:$0xff]
    %v91 = vld [vmem:[#allocation2 + $0x220] sm:$0xff]
    %v92 = vld [vmem:[#allocation2 + $0x228] sm:$0xff]
    %v93 = vld [vmem:[#allocation2 + $0x230] sm:$0xff]
    %v94 = vld [vmem:[#allocation2 + $0x238] sm:$0xff]
    %v95 = vld [vmem:[#allocation2 + $0x240] sm:$0xff]
    %v96 = vld [vmem:[#allocation2 + $0x248] sm:$0xff]
    %v97 = vld [vmem:[#allocation2 + $0x250] sm:$0xff]
    %v98 = vld [vmem:[#allocation2 + $0x258] sm:$0xff]
    %v99 = vld [vmem:[#allocation2 + $0x260] sm:$0xff]
    %v100 = vld [vmem:[#allocation2 + $0x268] sm:$0xff]
    %v101 = vld [vmem:[#allocation2 + $0x270] sm:$0xff]
    %v102 = vld [vmem:[#allocation2 + $0x278] sm:$0xff]
    %v103 = vld [vmem:[#allocation2 + $0x280] sm:$0xff]
    %v104 = vld [vmem:[#allocation2 + $0x288] sm:$0xff]
    %v105 = vld [vmem:[#allocation2 + $0x290] sm:$0xff]
    %v106 = vld [vmem:[#allocation2 + $0x298] sm:$0xff]
    %v107 = vld [vmem:[#allocation2 + $0x2a0] sm:$0xff]
    %v108 = vld [vmem:[#allocation2 + $0x2a8] sm:$0xff]
    %v109 = vld [vmem:[#allocation2 + $0x2b0] sm:$0xff]
    %v110 = vld [vmem:[#allocation2 + $0x2b8] sm:$0xff]
    %v111 = vld [vmem:[#allocation2 + $0x2c0] sm:$0xff]
    %v112 = vld [vmem:[#allocation2 + $0x2c8] sm:$0xff]
    %v113 = vld [vmem:[#allocation2 + $0x2d0] sm:$0xff]
    %v114 = vld [vmem:[#allocation2 + $0x2d8] sm:$0xff]
    %v115 = vld [vmem:[#allocation2 + $0x2e0] sm:$0xff]
    %v116 = vld [vmem:[#allocation2 + $0x2e8] sm:$0xff]
    %v117 = vld [vmem:[#allocation2 + $0x2f0] sm:$0xff]
    %v118 = vld [vmem:[#allocation2 + $0x2f8] sm:$0xff]
    %v119 = vld [vmem:[#allocation2 + $0x300] sm:$0xff]
    %v120 = vld [vmem:[#allocation2 + $0x308] sm:$0xff]
    %v121 = vld [vmem:[#allocation2 + $0x310] sm:$0xff]
    %v122 = vld [vmem:[#allocation2 + $0x318] sm:$0xff]
    %v123 = vld [vmem:[#allocation2 + $0x320] sm:$0xff]
    %v124 = vld [vmem:[#allocation2 + $0x328] sm:$0xff]
    %v125 = vld [vmem:[#allocation2 + $0x330] sm:$0xff]
    %v126 = vld [vmem:[#allocation2 + $0x338] sm:$0xff]
    %v127 = vld [vmem:[#allocation2 + $0x340] sm:$0xff]
    %v128 = vld [vmem:[#allocation2 + $0x348] sm:$0xff]
    %v129 = vld [vmem:[#allocation2 + $0x350] sm:$0xff]
    %v130 = vld [vmem:[#allocation2 + $0x358] sm:$0xff]
    %v131 = vld [vmem:[#allocation2 + $0x360] sm:$0xff]
    %v132 = vld [vmem:[#allocation2 + $0x368] sm:$0xff]
    %v133 = vld [vmem:[#allocation2 + $0x370] sm:$0xff]
    %v134 = vld [vmem:[#allocation2 + $0x378] sm:$0xff]
    %v135 = vld [vmem:[#allocation2 + $0x380] sm:$0xff]
    %v136 = vld [vmem:[#allocation2 + $0x388] sm:$0xff]
    %v137 = vld [vmem:[#allocation2 + $0x390] sm:$0xff]
    %v138 = vld [vmem:[#allocation2 + $0x398] sm:$0xff]
    %v139 = vld [vmem:[#allocation2 + $0x3a0] sm:$0xff]
    %v140 = vld [vmem:[#allocation2 + $0x3a8] sm:$0xff]
    %v141 = vld [vmem:[#allocation2 + $0x3b0] sm:$0xff]
    %v142 = vld [vmem:[#allocation2 + $0x3b8] sm:$0xff]
    %v143 = vld [vmem:[#allocation2 + $0x3c0] sm:$0xff]
    %v144 = vld [vmem:[#allocation2 + $0x3c8] sm:$0xff]
    %v145 = vld [vmem:[#allocation2 + $0x3d0] sm:$0xff]
    %v146 = vld [vmem:[#allocation2 + $0x3d8] sm:$0xff]
    %v147 = vld [vmem:[#allocation2 + $0x3e0] sm:$0xff]
    %v148 = vld [vmem:[#allocation2 + $0x3e8] sm:$0xff]
    %v149 = vld [vmem:[#allocation2 + $0x3f0] sm:$0xff]
    %v150 = vld [vmem:[#allocation2 + $0x3f8] sm:$0xff]
    %v151 = vadd.f32 %v23, %v24
    %v152 = vadd.f32 %v151, %v25
    %v153 = vadd.f32 %v152, %v26
    %v154 = vadd.f32 %v153, %v27
    %v155 = vadd.f32 %v154, %v28
    %v156 = vadd.f32 %v155, %v29
    %v157 = vadd.f32 %v156, %v30
    %v158 = vadd.f32 %v157, %v31
    %v159 = vadd.f32 %v158, %v32
    %v160 = vadd.f32 %v159, %v33
    %v161 = vadd.f32 %v160, %v34
    %v162 = vadd.f32 %v161, %v35
    %v163 = vadd.f32 %v162, %v36
    %v164 = vadd.f32 %v163, %v37
    %v165 = vadd.f32 %v164, %v38
    %v166 = vadd.f32 %v165, %v39
    %v167 = vadd.f32 %v166, %v40
    %v168 = vadd.f32 %v167, %v41
    %v169 = vadd.f32 %v168, %v42
    %v170 = vadd.f32 %v169, %v43
    %v171 = vadd.f32 %v170, %v44
    %v172 = vadd.f32 %v171, %v45
    %v173 = vadd.f32 %v172, %v46
    %v174 = vadd.f32 %v173, %v47
    %v175 = vadd.f32 %v174, %v48
    %v176 = vadd.f32 %v175, %v49
    %v177 = vadd.f32 %v176, %v50
    %v178 = vadd.f32 %v177, %v51
    %v179 = vadd.f32 %v178, %v52
    %v180 = vadd.f32 %v179, %v53
    %v181 = vadd.f32 %v180, %v54
    %v182 = vadd.f32 %v181, %v55
    %v183 = vadd.f32 %v182, %v56
    %v184 = vadd.f32 %v183, %v57
    %v185 = vadd.f32 %v184, %v58
    %v186 = vadd.f32 %v185, %v59
    %v187 = vadd.f32 %v186, %v60
    %v188 = vadd.f32 %v187, %v61
    %v189 = vadd.f32 %v188, %v62
    %v190 = vadd.f32 %v189, %v63
    %v191 = vadd.f32 %v190, %v64
    %v192 = vadd.f32 %v191, %v65
    %v193 = vadd.f32 %v192, %v66
    %v194 = vadd.f32 %v193, %v67
    %v195 = vadd.f32 %v194, %v68
    %v196 = vadd.f32 %v195, %v69
    %v197 = vadd.f32 %v196, %v70
    %v198 = vadd.f32 %v197, %v71
    %v199 = vadd.f32 %v198, %v72
    %v200 = vadd.f32 %v199, %v73
    %v201 = vadd.f32 %v200, %v74
    %v202 = vadd.f32 %v201, %v75
    %v203 = vadd.f32 %v202, %v76
    %v204 = vadd.f32 %v203, %v77
    %v205 = vadd.f32 %v204, %v78
    %v206 = vadd.f32 %v205, %v79
    %v207 = vadd.f32 %v206, %v80
    %v208 = vadd.f32 %v207, %v81
    %v209 = vadd.f32 %v208, %v82
    %v210 = vadd.f32 %v209, %v83
    %v211 = vadd.f32 %v210, %v84
    %v212 = vadd.f32 %v211, %v85
    %v213 = vadd.f32 %v212, %v86
    %v214 = vadd.f32 %v213, %v87
    %v215 = vadd.f32 %v214, %v88
    %v216 = vadd.f32 %v215, %v89
    %v217 = vadd.f32 %v216, %v90
    %v218 = vadd.f32 %v217, %v91
    %v219 = vadd.f32 %v218, %v92
    %v220 = vadd.f32 %v219, %v93
    %v221 = vadd.f32 %v220, %v94
    %v222 = vadd.f32 %v221, %v95
    %v223 = vadd.f32 %v222, %v96
    %v224 = vadd.f32 %v223, %v97
    %v225 = vadd.f32 %v224, %v98
    %v226 = vadd.f32 %v225, %v99
    %v227 = vadd.f32 %v226, %v100
    %v228 = vadd.f32 %v227, %v101
    %v229 = vadd.f32 %v228, %v102
    %v230 = vadd.f32 %v229, %v103
    %v231 = vadd.f32 %v230, %v104
    %v232 = vadd.f32 %v231, %v105
    %v233 = vadd.f32 %v232, %v106
    %v234 = vadd.f32 %v233, %v107
    %v235 = vadd.f32 %v234, %v108
    %v236 = vadd.f32 %v235, %v109
    %v237 = vadd.f32 %v236, %v110
    %v238 = vadd.f32 %v237, %v111
    %v239 = vadd.f32 %v238, %v112
    %v240 = vadd.f32 %v239, %v113
    %v241 = vadd.f32 %v240, %v114
    %v242 = vadd.f32 %v241, %v115
    %v243 = vadd.f32 %v242, %v116
    %v244 = vadd.f32 %v243, %v117
    %v245 = vadd.f32 %v244, %v118
    %v246 = vadd.f32 %v245, %v119
    %v247 = vadd.f32 %v246, %v120
    %v248 = vadd.f32 %v247, %v121
    %v249 = vadd.f32 %v248, %v122
    %v250 = vadd.f32 %v249, %v123
    %v251 = vadd.f32 %v250, %v124
    %v252 = vadd.f32 %v251, %v125
    %v253 = vadd.f32 %v252, %v126
    %v254 = vadd.f32 %v253, %v127
    %v255 = vadd.f32 %v254, %v128
    %v256 = vadd.f32 %v255, %v129
    %v257 = vadd.f32 %v256, %v130
    %v258 = vadd.f32 %v257, %v131
    %v259 = vadd.f32 %v258, %v132
    %v260 = vadd.f32 %v259, %v133
    %v261 = vadd.f32 %v260, %v134
    %v262 = vadd.f32 %v261, %v135
    %v263 = vadd.f32 %v262, %v136
    %v264 = vadd.f32 %v263, %v137
    %v265 = vadd.f32 %v264, %v138
    %v266 = vadd.f32 %v265, %v139
    %v267 = vadd.f32 %v266, %v140
    %v268 = vadd.f32 %v267, %v141
    %v269 = vadd.f32 %v268, %v142
    %v270 = vadd.f32 %v269, %v143
    %v271 = vadd.f32 %v270, %v144
    %v272 = vadd.f32 %v271, %v145
    %v273 = vadd.f32 %v272, %v146
    %v274 = vadd.f32 %v273, %v147
    %v275 = vadd.f32 %v274, %v148
    %v276 = vadd.f32 %v275, %v149
    %v277 = vadd.f32 %v276, %v150
    %v278 = vadd.f32 %v277, 0.0
    %279 = vst [vmem:[#allocation5] sm:$0xff] %v278
    // Predicated region
    $region10: #{tpu_custom_call.1} parent=1 // pred_check
      _
    $region11: #{tpu_custom_call.1} parent=1 // pred_check_branch
      %281 = sbr.rel (0) target = $region13
    $region12: #{tpu_custom_call.1} parent=1 // pred_region
      %s283 = ssub.s32 128, 128
      %284 = vsyncadd [#allocation4], %s283
      %s286 = sshll.u32 [#allocation5], 4
      %s287 = int_to_ptr.vmem [resolvable:$true] %s286
      %289 = dma.vmem_to_hbm [thread:$0]  %s287, 128, %s1, [#allocation4]
    $region13: #{tpu_custom_call.1} parent=1 // pred_fallthru
      _
    // Predicated region
    $region14: #{tpu_custom_call.1} parent=1 // pred_check
      _
    $region15: #{tpu_custom_call.1} parent=1 // pred_check_branch
      %291 = sbr.rel (0) target = $region17
    $region16: #{tpu_custom_call.1} parent=1 // pred_region
      %292 = dma.done [#allocation4], 128
    $region17: #{tpu_custom_call.1} parent=1 // pred_fallthru
      _
    %293 = vsyncpa [#allocation3], 1
    %294 = vsyncpa [#allocation4], 1

</llo_original>
